<compile_context>
chip_gen: v7x
topology: tpu7x:2x2x1
jax: 0.10.0
libtpu: 0.0.40
codegen_flags: <defaults>
</compile_context>

<pallas_src>
import jax
import jax.numpy as jnp
from jax.experimental import pallas as pl
from jax.experimental.pallas import tpu as pltpu


_LANE = 128
_VMEM_LIMIT_BYTES = 48 * 1024 * 1024    # <= v7x 64 MiB physical; fine on v5e/v6e
_TILE_BUDGET_BYTES = 24 * 1024 * 1024   # conservative sizing target (v7x-safe)


def _round_up(x, m):
    return ((x + m - 1) // m) * m


def _cdiv(a, b):
    return -(-a // b)


# --------------------------------------------------------------------------- #
# Kernels
# --------------------------------------------------------------------------- #
def _folded_kernel(x_ref, w_ref, b_ref, out_ref):
    # x_ref:   (TB, RW)    batch tile of flattened rows, native dtype (f32/bf16)
    # w_ref:   (RW, NPAD)  folded conv+pool+fc weight, resident across the grid
    # b_ref:   (1, NPAD)   folded bias, f32 (-1e30 in padded columns)
    # out_ref: (TB, NPAD)  log-probabilities (padded cols hold ~-1e30)
    xw = x_ref[...].astype(w_ref.dtype)            # in-kernel cast (VPU, hidden)
    logits = jnp.dot(xw, w_ref[...],
                     preferred_element_type=jnp.float32) + b_ref[...]
    m = jnp.max(logits, axis=-1, keepdims=True)
    z = logits - m
    lse = jnp.log(jnp.sum(jnp.exp(z), axis=-1, keepdims=True))
    out_ref[...] = (z - lse).astype(out_ref.dtype)


def _folded_kernel_ksplit(x_ref, w_ref, b_ref, out_ref, acc_ref):
    # Same math with the R*W contraction split over grid axis 1, accumulated
    # in an f32 VMEM scratch; softmax runs on the last k step only.
    k = pl.program_id(1)

    @pl.when(k == 0)
    def _():
        acc_ref[...] = jnp.zeros_like(acc_ref)

    xw = x_ref[...].astype(w_ref.dtype)
    acc_ref[...] += jnp.dot(xw, w_ref[...], preferred_element_type=jnp.float32)

    @pl.when(k == pl.num_programs(1) - 1)
    def _():
        logits = acc_ref[...] + b_ref[...]
        m = jnp.max(logits, axis=-1, keepdims=True)
        z = logits - m
        lse = jnp.log(jnp.sum(jnp.exp(z), axis=-1, keepdims=True))
        out_ref[...] = (z - lse).astype(out_ref.dtype)


# --------------------------------------------------------------------------- #
# Offline parameter folding
# --------------------------------------------------------------------------- #
def prepare_params(conv_w, conv_b, fc_w, fc_b, num_rows, row_len,
                   compute_dtype=jnp.bfloat16, lane_pad=_LANE):
    """Fold conv+pool+fc into a padded (R*W, NPAD) weight and (1, NPAD) bias.

    Weights are static per deployment: call ONCE and reuse the result for
    every forward call (all per-call preprocessing is hoisted off the path).
    Padded bias columns hold -1e30 so they vanish under log_softmax (finite in
    both f32 and bf16 outputs; do NOT use f16 outputs with this sentinel).
    """
    C, _, K = conv_w.shape
    N = fc_w.shape[0]
    R, W = num_rows, row_len
    pad = K // 2

    cw = conv_w[:, 0, :].astype(jnp.float32)                          # (C, K)
    t = jnp.arange(W, dtype=jnp.int32)[:, None]
    d = jnp.arange(K, dtype=jnp.int32)[None, :] - pad
    clip = (t >= jnp.maximum(d, 0)) & (t < jnp.minimum(W + d, W))     # (W, K)
    Mw = (clip.astype(jnp.float32) @ cw.T) * (1.0 / W)                # (W, C)

    fw3 = jnp.transpose(fc_w.reshape(N, R, C).astype(jnp.float32),
                        (1, 2, 0))                                    # (R, C, N)
    w_full = jnp.einsum("tc,rcn->rtn", Mw, fw3).reshape(R * W, N)     # (R*W, N)
    b_full = fc_b.astype(jnp.float32) + jnp.einsum(
        "c,rcn->n", conv_b.astype(jnp.float32), fw3)                  # (N,)

    # TODO(synk): if R*W is not a multiple of 128 AND the upstream pipeline can
    # produce a lane-padded x at no extra HBM cost, also zero-pad the R*W rows
    # here to unlock the K-split path / unmasked x vregs for non-aligned R*W.
    npad = _round_up(N, lane_pad)
    w_pad = jnp.zeros((R * W, npad), jnp.float32).at[:, :N].set(w_full)
    b_pad = jnp.full((1, npad), -1e30, jnp.float32).at[0, :N].set(b_full)
    return w_pad.astype(compute_dtype), b_pad


# --------------------------------------------------------------------------- #
# Tile sizing
# --------------------------------------------------------------------------- #
def _choose_batch_tile(batch, per_row_bytes, resident_bytes,
                       budget_bytes=_TILE_BUDGET_BYTES, max_batch_tile=None):
    """Size the batch tile against the FULL per-step VMEM footprint and cap it
    so the grid has several steps (pipelining + both v7x TensorCores)."""
    budget = max(budget_bytes - resident_bytes, 8 * per_row_bytes)
    tb = max(8, (budget // per_row_bytes) // 8 * 8)
    # 512-row tiles already sit at ~85% of the HBM roofline; aim for >=~8 steps.
    tb = min(tb, max(512, _round_up(_cdiv(batch, 8), 8)))
    if max_batch_tile is not None:
        tb = min(tb, max_batch_tile)
    tb = min(tb, batch)
    if tb < batch:
        tb = max(8, (tb // 8) * 8)
        # Nudge the step count to a multiple of 2 so both v7x cores get work.
        nsteps = _cdiv(batch, tb)
        if nsteps > 1 and nsteps % 2 == 1:
            cand = max(8, _round_up(_cdiv(batch, nsteps + 1), 8))
            if _cdiv(batch, cand) % 2 == 0:
                tb = cand
    return tb


# --------------------------------------------------------------------------- #
# Forward wrapper
# --------------------------------------------------------------------------- #
def conv1d_rowwise_classifier(x, w_pad, b_pad, num_classes, *,
                              out_dtype=jnp.bfloat16,
                              return_padded=False,
                              max_batch_tile=None,
                              force_k_split=False):
    """x: (B, 1, R, W) in its native dtype; (w_pad, b_pad) from prepare_params.

    Returns (B, num_classes) log-probabilities in `out_dtype`, or the padded
    (B, NPAD) block when return_padded=True so consumers can skip the extra
    slice pass over HBM (padded columns ~= -1e30).
    """
    B = x.shape[0]
    RW, NPAD = w_pad.shape
    assert x.size == B * RW, "x shape inconsistent with folded weight"
    xf = x.reshape(B, RW)                  # native dtype; cast happens in-kernel

    x_item = jnp.dtype(xf.dtype).itemsize
    w_item = jnp.dtype(w_pad.dtype).itemsize
    o_item = jnp.dtype(out_dtype).itemsize

    # Resident-weight footprint (budget 2x for the pipeline's buffering).
    w_resident = 2 * RW * NPAD * w_item + 2 * 2 * NPAD * 4
    use_ksplit = force_k_split or (w_resident > _TILE_BUDGET_BYTES // 2)
    if use_ksplit and RW % _LANE != 0:
        # TODO(synk): pad R*W to a multiple of 128 offline to enable K-split
        # for non-aligned R*W; fall back to the resident-weight kernel.
        use_ksplit = False

    softmax_tmp = 3 * NPAD * 4             # logits / z / exp f32 temporaries

    if not use_ksplit:
        per_row = 2 * RW * x_item + 2 * NPAD * o_item + softmax_tmp
        TB = _choose_batch_tile(B, per_row, w_resident,
                                max_batch_tile=max_batch_tile)
        grid = (pl.cdiv(B, TB),)
        grid_spec = pltpu.PrefetchScalarGridSpec(
            num_scalar_prefetch=0,
            grid=grid,
            in_specs=[
                pl.BlockSpec((TB, RW), lambda i: (i, 0)),     # streamed x tile
                pl.BlockSpec((RW, NPAD), lambda i: (0, 0)),   # resident weight
                pl.BlockSpec((1, NPAD), lambda i: (0, 0)),    # resident bias
            ],
            out_specs=pl.BlockSpec((TB, NPAD), lambda i: (i, 0)),
        )
        kernel = _folded_kernel
        dim_sem = ("parallel",)
    else:
        # Contraction tile: a multiple of 128 dividing RW, keeping >= 2 k steps.
        TK = _LANE
        while (RW % (2 * TK) == 0 and RW // (2 * TK) >= 2 and
               2 * (2 * TK) * NPAD * w_item <= _TILE_BUDGET_BYTES // 4 and
               2 * TK <= 2048):
            TK *= 2
        w_tile = 2 * TK * NPAD * w_item + 2 * 2 * NPAD * 4
        per_row = (2 * TK * x_item + 2 * NPAD * o_item
                   + NPAD * 4 + softmax_tmp)                  # + acc scratch
        TB = _choose_batch_tile(B, per_row, w_tile,
                                max_batch_tile=max_batch_tile)
        grid = (pl.cdiv(B, TB), RW // TK)
        grid_spec = pltpu.PrefetchScalarGridSpec(
            num_scalar_prefetch=0,
            grid=grid,
            in_specs=[
                pl.BlockSpec((TB, TK), lambda i, k: (i, k)),
                pl.BlockSpec((TK, NPAD), lambda i, k: (k, 0)),
                pl.BlockSpec((1, NPAD), lambda i, k: (0, 0)),
            ],
            out_specs=pl.BlockSpec((TB, NPAD), lambda i, k: (i, 0)),
            scratch_shapes=[pltpu.VMEM((TB, NPAD), jnp.float32)],
        )
        kernel = _folded_kernel_ksplit
        dim_sem = ("parallel", "arbitrary")

    out = pl.pallas_call(
        kernel,
        out_shape=jax.ShapeDtypeStruct((B, NPAD), out_dtype),
        grid_spec=grid_spec,
        compiler_params=pltpu.CompilerParams(
            dimension_semantics=dim_sem,
            vmem_limit_bytes=_VMEM_LIMIT_BYTES,
        ),
        cost_estimate=pl.CostEstimate(
            flops=2 * B * RW * NPAD + 8 * B * NPAD,
            transcendentals=B * NPAD,
            bytes_accessed=(B * RW * x_item + RW * NPAD * w_item
                            + NPAD * 4 + B * NPAD * o_item),
        ),
    )(xf, w_pad, b_pad)

    if return_padded:
        return out
    return out[:, :num_classes]


# --------------------------------------------------------------------------- #
# Pure-JAX reference matching the PyTorch forward literally
# --------------------------------------------------------------------------- #
def _ref_forward(x, conv_w, conv_b, fc_w, fc_b):
    B, _, R, W = x.shape
    C, _, K = conv_w.shape
    pad = K // 2
    xr = x[:, 0].reshape(B * R, W)
    xp = jnp.pad(xr, ((0, 0), (pad, pad)))
    cols = jnp.stack([xp[:, t: t + K] for t in range(W)], axis=1)    # (M, W, K)
    y = jnp.einsum("mtk,ck->mct", cols, conv_w[:, 0, :]) + conv_b[:, None]
    pooled = y.mean(axis=-1)                                         # (M, C)
    feats = pooled.reshape(B, R * C)
    logits = feats @ fc_w.T + fc_b
    return jax.nn.log_softmax(logits, axis=1)


if __name__ == "__main__":
    key = jax.random.PRNGKey(0)
    k1, k2, k3, k4, k5, k6 = jax.random.split(key, 6)

    # Small, module-consistent shapes: batch=2, rows=4, row length=16,
    # conv channels=64, kernel=5, classes=6.
    B, R, W = 2, 4, 16
    C, K, N = 64, 5, 6

    x = jax.random.normal(k1, (B, 1, R, W), jnp.float32)
    conv_w = 0.1 * jax.random.normal(k2, (C, 1, K), jnp.float32)
    conv_b = 0.1 * jax.random.normal(k3, (C,), jnp.float32)
    fc_w = 0.1 * jax.random.normal(k4, (N, R * C), jnp.float32)
    fc_b = 0.1 * jax.random.normal(k5, (N,), jnp.float32)

    ref = _ref_forward(x, conv_w, conv_b, fc_w, fc_b)

    # 1) f32 weights + f32 output: verifies the algebraic folding is exact.
    w32, b32 = prepare_params(conv_w, conv_b, fc_w, fc_b, R, W,
                              compute_dtype=jnp.float32)
    out32 = jax.block_until_ready(
        conv1d_rowwise_classifier(x, w32, b32, N, out_dtype=jnp.float32))
    assert out32.shape == (B, N)
    assert jnp.allclose(out32, ref, atol=1e-4, rtol=1e-4)

    # 2) Deployment default: bf16 weights, bf16 output, f32 x cast in-kernel.
    wbf, bbf = prepare_params(conv_w, conv_b, fc_w, fc_b, R, W,
                              compute_dtype=jnp.bfloat16)
    outbf = jax.block_until_ready(conv1d_rowwise_classifier(x, wbf, bbf, N))
    assert outbf.shape == (B, N)
    assert jnp.allclose(outbf.astype(jnp.float32), ref, atol=3e-2, rtol=3e-2)

    # 3) Padded-output consumer path (skips the slice pass over HBM).
    outpad = jax.block_until_ready(
        conv1d_rowwise_classifier(x, wbf, bbf, N, return_padded=True))
    assert outpad.shape == (B, wbf.shape[1])
    assert jnp.allclose(outpad[:, :N].astype(jnp.float32), ref,
                        atol=3e-2, rtol=3e-2)

    # 4) K-split kernel + multi-step batch grid + partial last batch tile:
    #    R*W=256 -> TK=128 (2 "arbitrary" k steps), batch 10 with 8-row tiles.
    B2, R2, W2 = 10, 4, 64
    x2 = jax.random.normal(k6, (B2, 1, R2, W2), jnp.float32)
    fc_w2 = 0.1 * jax.random.normal(k4, (N, R2 * C), jnp.float32)
    ref2 = _ref_forward(x2, conv_w, conv_b, fc_w2, fc_b)
    w2p, b2p = prepare_params(conv_w, conv_b, fc_w2, fc_b, R2, W2,
                              compute_dtype=jnp.float32)
    out2 = jax.block_until_ready(
        conv1d_rowwise_classifier(x2, w2p, b2p, N, out_dtype=jnp.float32,
                                  max_batch_tile=8, force_k_split=True))
    assert out2.shape == (B2, N)
    assert jnp.allclose(out2, ref2, atol=1e-4, rtol=1e-4)

    print("KERNEL_OK")
</pallas_src>

<mosaic_0001>
module attributes {stable_mosaic.version = 11 : i64} {
  func.func @_folded_kernel(%arg0: i32, %arg1: memref<2x64xf32, #tpu.memory_space<vmem>>, %arg2: memref<64x128xf32, #tpu.memory_space<vmem>>, %arg3: memref<1x128xf32, #tpu.memory_space<vmem>>, %arg4: memref<2x128xf32, #tpu.memory_space<vmem>>) attributes {dimension_semantics = [#tpu.dimension_semantics<parallel>], iteration_bounds = array<i64: 1>, scalar_prefetch = 0 : i64, scratch_operands = 0 : i64, tpu.core_type = #tpu.core_type<tc>, window_params = [{transform_indices = @transform_0, window_bounds = array<i64: 2, 64>}, {pipeline_mode = #tpu.pipeline_mode<synchronous>, transform_indices = @transform_1, window_bounds = array<i64: 64, 128>}, {pipeline_mode = #tpu.pipeline_mode<synchronous>, transform_indices = @transform_2, window_bounds = array<i64: 1, 128>}, {transform_indices = @transform_3, window_bounds = array<i64: 2, 128>}]} {
    %c0 = arith.constant 0 : index
    %c0_0 = arith.constant 0 : index
    %0 = vector.load %arg1[%c0, %c0_0] : memref<2x64xf32, #tpu.memory_space<vmem>>, vector<2x64xf32>
    %c0_1 = arith.constant 0 : index
    %c0_2 = arith.constant 0 : index
    %1 = vector.load %arg2[%c0_1, %c0_2] : memref<64x128xf32, #tpu.memory_space<vmem>>, vector<64x128xf32>
    %cst = arith.constant dense<0.000000e+00> : vector<2x128xf32>
    %2 = tpu.matmul %0, %1, %cst {dimension_numbers = #tpu.dot_dimension_numbers<[1], [0], [0], [1], [0, 0, 1, 1], [], []>} : vector<2x64xf32>, vector<64x128xf32>, vector<2x128xf32> -> vector<2x128xf32>
    %c0_3 = arith.constant 0 : index
    %c0_4 = arith.constant 0 : index
    %3 = vector.load %arg3[%c0_3, %c0_4] : memref<1x128xf32, #tpu.memory_space<vmem>>, vector<1x128xf32>
    %4 = vector.broadcast %3 : vector<1x128xf32> to vector<2x128xf32>
    %5 = arith.addf %2, %4 : vector<2x128xf32>
    %cst_5 = arith.constant dense<0xFF800000> : vector<2xf32>
    %6 = vector.multi_reduction <maximumf>, %5, %cst_5 [1] : vector<2x128xf32> to vector<2xf32>
    %7 = vector.shape_cast %6 : vector<2xf32> to vector<2x1xf32>
    %8 = vector.broadcast %7 : vector<2x1xf32> to vector<2x128xf32>
    %9 = arith.subf %5, %8 : vector<2x128xf32>
    %10 = math.exp %9 : vector<2x128xf32>
    %cst_6 = arith.constant dense<0.000000e+00> : vector<2xf32>
    %11 = vector.multi_reduction <add>, %10, %cst_6 [1] : vector<2x128xf32> to vector<2xf32>
    %12 = vector.shape_cast %11 : vector<2xf32> to vector<2x1xf32>
    %13 = math.log %12 : vector<2x1xf32>
    %14 = vector.broadcast %13 : vector<2x1xf32> to vector<2x128xf32>
    %15 = arith.subf %9, %14 : vector<2x128xf32>
    %c0_7 = arith.constant 0 : index
    %c0_8 = arith.constant 0 : index
    %16 = vector.load %arg4[%c0_7, %c0_8] : memref<2x128xf32, #tpu.memory_space<vmem>>, vector<2x128xf32>
    tpu.vector_store %arg4[%c0_7, %c0_8], %15 {strides = array<i32>} : memref<2x128xf32, #tpu.memory_space<vmem>>, vector<2x128xf32>,
    return
  }
  func.func @transform_0(%arg0: i32) -> (i32, i32) {
    %c0_i32 = arith.constant 0 : i32
    %c0_i32_0 = arith.constant 0 : i32
    return %arg0, %c0_i32 : i32, i32
  }
  func.func @transform_1(%arg0: i32) -> (i32, i32) {
    %c0_i32 = arith.constant 0 : i32
    %c0_i32_0 = arith.constant 0 : i32
    %c0_i32_1 = arith.constant 0 : i32
    return %c0_i32, %c0_i32_0 : i32, i32
  }
  func.func @transform_2(%arg0: i32) -> (i32, i32) {
    %c0_i32 = arith.constant 0 : i32
    %c0_i32_0 = arith.constant 0 : i32
    %c0_i32_1 = arith.constant 0 : i32
    return %c0_i32, %c0_i32_0 : i32, i32
  }
  func.func @transform_3(%arg0: i32) -> (i32, i32) {
    %c0_i32 = arith.constant 0 : i32
    %c0_i32_0 = arith.constant 0 : i32
    return %arg0, %c0_i32 : i32, i32
  }
}

</mosaic_0001>

<llo_original>
// kernel: tpu_custom_call.1
$region0: #{tpu_custom_call.1}
  #allocation0 [shape = 'u32[]', space=smem, size = 0x4, offset = 0x4, fixed_abs, tag = 'smem constant byte address 0x4 - core index']
  #allocation1 [shape = 'u32[144,128]{1,0:T(1,128)}', space=vmem, size = 0x12000, scoped, tag = 'internal scratch']
  %s0 = inlined_call_operand.hbm [shape: f32[2,64], index: 0, kind: input, shape index: {}]
  %s1 = inlined_call_operand.hbm [shape: f32[64,128], index: 1, kind: input, shape index: {}]
  %s2 = inlined_call_operand.vmem [shape: f32[1,128], index: 2, kind: input, shape index: {}]
  %s3 = inlined_call_operand.hbm [shape: f32[2,128], index: 3, kind: output, shape index: {}]
  %s4 = sld [smem:[#allocation0]]
  $region30: #{tpu_custom_call.1} parent=0
    _
  %s6 = ssub.s32 1, %s4
  %s7 = scalar_select 0, %s6, %s4
  $region1: #{tpu_custom_call.1} parent=0
    #allocation2 [shape = 'u8[1024]{0}', space=vmem, size = 0x400, scoped, tag = 'input window, operand 0, single buffered']
    #allocation3 [shape = 's32[1]{0}', space=sflag, size = 0x4, scoped, tag = 'scoped memory for tpu_custom_call.1']
    #allocation4 [shape = 's32[1]{0}', space=sflag, size = 0x4, scoped, tag = 'scoped memory for tpu_custom_call.1']
    #allocation5 [shape = 'u8[32768]{0}', space=vmem, size = 0x8000, scoped, tag = 'input window, operand 1, single buffered']
    #allocation6 [shape = 's32[1]{0}', space=sflag, size = 0x4, scoped, tag = 'scoped memory for tpu_custom_call.1']
    #allocation7 [shape = 'u8[1024]{0}', space=vmem, size = 0x400, scoped, tag = 'output window, operand 0, single buffered']
    %8 = vsyncpa [#allocation3], 0
    %9 = vsyncpa [#allocation6], 0
    %10 = vsyncpa [#allocation4], 0
    // Predicated region
    $region2: #{tpu_custom_call.1} parent=1 // pred_check
      _
    $region3: #{tpu_custom_call.1} parent=1 // pred_check_branch
      %12 = sbr.rel (0) target = $region5
    $region4: #{tpu_custom_call.1} parent=1 // pred_region
      %s14 = ssub.s32 32, 32
      %15 = vsyncadd [#allocation3], %s14
      %s17 = sshll.u32 [#allocation2], 4
      %s18 = int_to_ptr.vmem [resolvable:$true] %s17
      %20 = dma.hbm_to_vmem [thread:$0]  %s0, 32, %s18, [#allocation3]
    $region5: #{tpu_custom_call.1} parent=1 // pred_fallthru
      _
    // Predicated region
    $region6: #{tpu_custom_call.1} parent=1 // pred_check
      _
    $region7: #{tpu_custom_call.1} parent=1 // pred_check_branch
      %22 = sbr.rel (0) target = $region9
    $region8: #{tpu_custom_call.1} parent=1 // pred_region
      %s24 = ssub.s32 1024, 1024
      %25 = vsyncadd [#allocation6], %s24
      %s26 = sshll.u32 [#allocation5], 4
      %s27 = int_to_ptr.vmem [resolvable:$true] %s26
      %32 = dma.hbm_to_vmem [thread:$0]  %s1, 1024, %s27, [#allocation6], 128, 128, 8
    $region9: #{tpu_custom_call.1} parent=1 // pred_fallthru
      _
    // Predicated region
    $region10: #{tpu_custom_call.1} parent=1 // pred_check
      _
    $region11: #{tpu_custom_call.1} parent=1 // pred_check_branch
      %34 = sbr.rel (0) target = $region13
    $region12: #{tpu_custom_call.1} parent=1 // pred_region
      _
    $region13: #{tpu_custom_call.1} parent=1 // pred_fallthru
      _
    // Predicated region
    $region14: #{tpu_custom_call.1} parent=1 // pred_check
      _
    $region15: #{tpu_custom_call.1} parent=1 // pred_check_branch
      %36 = sbr.rel (0) target = $region17
    $region16: #{tpu_custom_call.1} parent=1 // pred_region
      %37 = dma.done [#allocation3], 32
    $region17: #{tpu_custom_call.1} parent=1 // pred_fallthru
      _
    // Predicated region
    $region18: #{tpu_custom_call.1} parent=1 // pred_check
      _
    $region19: #{tpu_custom_call.1} parent=1 // pred_check_branch
      %39 = sbr.rel (0) target = $region21
    $region20: #{tpu_custom_call.1} parent=1 // pred_region
      %40 = dma.done [#allocation6], 1024
    $region21: #{tpu_custom_call.1} parent=1 // pred_fallthru
      _
    %v41 = vld [vmem:[#allocation2] sm:$0x3]
    %v42 = vld [vmem:[#allocation5] sm:$0xff]
    %v43 = vld [vmem:[#allocation5 + $0x8] sm:$0xff]
    %v44 = vld [vmem:[#allocation5 + $0x10] sm:$0xff]
    %v45 = vld [vmem:[#allocation5 + $0x18] sm:$0xff]
    %v46 = vld [vmem:[#allocation5 + $0x20] sm:$0xff]
    %v47 = vld [vmem:[#allocation5 + $0x28] sm:$0xff]
    %v48 = vld [vmem:[#allocation5 + $0x30] sm:$0xff]
    %v49 = vld [vmem:[#allocation5 + $0x38] sm:$0xff]
    %v50 = vld [vmem:[%s2] sm:$0x1]
    %v52 = vlaneseq
    %v53 = vshrl.u32 %v52, 7
    %v54 = vsub.s32 0, %v53
    %v55 = vrot.slane %v50, %v54
    %vm57 = vcmask 523264
    %v59 = vsel %vm57, %v41, 0
    %61 = vmatprep.subr.mxu0 0.0
    %62 = vmatpush1.msra.mxu0 %v42
    %63 = vmatprep.subr.mxu0 0.0
    %64 = vmatpush1.msra.mxu0 %v43
    %65 = vmatprep.subr.mxu0 0.0
    %66 = vmatpush1.msra.mxu0 %v44
    %67 = vmatprep.subr.mxu0 0.0
    %68 = vmatpush1.msra.mxu0 %v45
    %69 = vmatprep.subr.mxu0 0.0
    %70 = vmatpush1.msra.mxu0 %v46
    %71 = vmatprep.subr.mxu0 0.0
    %72 = vmatpush1.msra.mxu0 %v47
    %73 = vmatprep.subr.mxu0 0.0
    %74 = vmatpush1.msra.mxu0 %v48
    %75 = vmatprep.subr.mxu0 0.0
    %76 = vmatpush1.msra.mxu0 %v49
    %77 = vmatprep.subr.mxu0 0.0
    %78 = vmatpush1.msra.mxu0 0.0
    %79 = vmatprep.subr.mxu0 0.0
    %80 = vmatpush1.msra.mxu0 0.0
    %81 = vmatprep.subr.mxu0 0.0
    %82 = vmatpush1.msra.mxu0 0.0
    %83 = vmatprep.subr.mxu0 0.0
    %84 = vmatpush1.msra.mxu0 0.0
    %85 = vmatprep.subr.mxu0 0.0
    %86 = vmatpush1.msra.mxu0 0.0
    %87 = vmatprep.subr.mxu0 0.0
    %88 = vmatpush1.msra.mxu0 0.0
    %89 = vmatprep.subr.mxu0 0.0
    %90 = vmatpush1.msra.mxu0 0.0
    %91 = vmatprep.subr.mxu0 0.0
    %92 = vmatpush1.msra.mxu0 0.0
    %93 = vmatprep.subr.mxu0 0.0
    %94 = vmatpush1.msra.mxu0 0.0
    %95 = vmatprep.subr.mxu0 0.0
    %96 = vmatpush1.msra.mxu0 0.0
    %97 = vmatprep.subr.mxu0 0.0
    %98 = vmatpush1.msra.mxu0 0.0
    %99 = vmatprep.subr.mxu0 0.0
    %100 = vmatpush1.msra.mxu0 0.0
    %101 = vmatprep.subr.mxu0 0.0
    %102 = vmatpush1.msra.mxu0 0.0
    %103 = vmatprep.subr.mxu0 0.0
    %104 = vmatpush1.msra.mxu0 0.0
    %105 = vmatprep.subr.mxu0 0.0
    %106 = vmatpush1.msra.mxu0 0.0
    %107 = vmatprep.subr.mxu0 0.0
    %108 = vmatpush1.msra.mxu0 0.0
    %109 = vmatprep.subr.mxu0 0.0
    %110 = vmatpush1.msra.mxu0 0.0
    %111 = vmatprep.subr.mxu0 0.0
    %112 = vmatpush1.msra.mxu0 0.0
    %113 = vmatprep.subr.mxu0 0.0
    %114 = vmatpush1.msra.mxu0 0.0
    %115 = vmatprep.subr.mxu0 0.0
    %116 = vmatpush1.msra.mxu0 0.0
    %117 = vmatprep.subr.mxu0 0.0
    %118 = vmatpush1.msra.mxu0 0.0
    %119 = vmatprep.subr.mxu0 0.0
    %120 = vmatpush1.msra.mxu0 0.0
    %121 = vmatprep.subr.mxu0 0.0
    %122 = vmatpush1.msra.mxu0 0.0
    %123 = vmatprep.subr.mxu0 0.0
    %124 = vmatpush1.msra.mxu0 0.0
    %125 = vmatprep.mubr.f32.mxu0 0.0
    %126 = vmatmul.mubr.f32.gmra.mrb[0].mxu0 %v59
    %v127 = vpop.f32.mrb[0].mxu0
    %v128 = vadd.f32 %v55, %v127
    %v129 = vpop.f32.mrb[0].mxu0
    %130 = vdwg.mxu0
    %vm131 = vcmask 1041408
    %v132 = vsel %vm131, %v128, -inf
    %133 = vmax.xlane.f32.xlu0 %v132
    %v134 = vpop.xlane.xlu0 %133
    %v135 = vsub.f32 %v128, %v134
    %v136 = vmul.f32 %v135, 1.442695
    %v137 = vpow.pop %v136
    %v138 = vsel %vm131, %v137, 0.0
    %139 = vadd.xlane.f32.xlu0 %v138
    %v140 = vpop.xlane.xlu0 %139
    %v141 = vlog2.pop %v140
    %v142 = vmul.f32 %v141, 0.6931472
    %v143 = vsub.f32 %v135, %v142
    %144 = vst [vmem:[#allocation7] sm:$0x3] %v143
    // Predicated region
    $region22: #{tpu_custom_call.1} parent=1 // pred_check
      _
    $region23: #{tpu_custom_call.1} parent=1 // pred_check_branch
      %146 = sbr.rel (0) target = $region25
    $region24: #{tpu_custom_call.1} parent=1 // pred_region
      %s148 = ssub.s32 32, 32
      %149 = vsyncadd [#allocation4], %s148
      %s151 = sshll.u32 [#allocation7], 4
      %s152 = int_to_ptr.vmem [resolvable:$true] %s151
      %154 = dma.vmem_to_hbm [thread:$0]  %s152, 32, %s3, [#allocation4]
    $region25: #{tpu_custom_call.1} parent=1 // pred_fallthru
      _
    // Predicated region
    $region26: #{tpu_custom_call.1} parent=1 // pred_check
      _
    $region27: #{tpu_custom_call.1} parent=1 // pred_check_branch
      %156 = sbr.rel (0) target = $region29
    $region28: #{tpu_custom_call.1} parent=1 // pred_region
      %157 = dma.done [#allocation4], 32
    $region29: #{tpu_custom_call.1} parent=1 // pred_fallthru
      _
    %158 = vsyncpa [#allocation3], 1
    %159 = vsyncpa [#allocation6], 1
    %160 = vsyncpa [#allocation4], 1

</llo_original>
